<compile_context>
chip_gen: v6e
topology: v6e:2x2x1
jax: 0.10.0
libtpu: 0.0.40
codegen_flags: <defaults>
</compile_context>

<pallas_src>
import functools

import jax
import jax.numpy as jnp
from jax.experimental import pallas as pl
from jax.experimental.pallas import tpu as pltpu

HIDDEN = 16
LANE = 128
SUBLANE = 8


def _round_up(x, m):
    return ((x + m - 1) // m) * m


def mlp_kernel(x_ref, w1_ref, b1_ref, w2_ref, b2_ref, w3_ref, b3_ref, o_ref):
    # Entire MLP hot path (3 matmuls + biases + ReLUs) fused in one kernel.
    # Matmuls accumulate in f32 regardless of input dtype; biases stay f32.
    x = x_ref[...]
    h = jnp.dot(x, w1_ref[...], preferred_element_type=jnp.float32) + b1_ref[...]
    h = jnp.maximum(h, 0.0).astype(x.dtype)
    h = jnp.dot(h, w2_ref[...], preferred_element_type=jnp.float32) + b2_ref[...]
    h = jnp.maximum(h, 0.0).astype(x.dtype)
    o = jnp.dot(h, w3_ref[...], preferred_element_type=jnp.float32) + b3_ref[...]
    o_ref[...] = o.astype(o_ref.dtype)


def spec_op(x, params, *, tile_m=None, compute_dtype=jnp.float32):
    """x: (B, k_in) float32. params: dict of transposed weights / biases.

    Returns (B, k_out) float32, matching the PyTorch SpecOp forward.
    """
    B, k_in = x.shape
    k_out = params["w3"].shape[1]

    # --- lane-dense output: pad the last layer to a 128-wide output ----------
    out_pad = _round_up(k_out, LANE)
    w3 = jnp.pad(params["w3"], ((0, 0), (0, out_pad - k_out)))
    b3 = jnp.pad(params["b3"], ((0, 0), (0, out_pad - k_out)))

    # --- batch tiling ---------------------------------------------------------
    # Explicit tile so grid >= 2 for large B (pipelining + v7x dual-TC), while
    # small batches collapse to a single 8-row-aligned tile.
    if tile_m is None:
        tile_m = 512 if B >= 512 else _round_up(B, SUBLANE)
    tile_m = _round_up(max(tile_m, SUBLANE), SUBLANE)
    b_pad = _round_up(B, tile_m)
    if b_pad != B:
        x = jnp.pad(x, ((0, b_pad - B), (0, 0)))  # pad rows computed, then sliced off
    grid = (b_pad // tile_m,)

    # --- dtypes ---------------------------------------------------------------
    xc = x.astype(compute_dtype)
    w1 = params["w1"].astype(compute_dtype)
    w2 = params["w2"].astype(compute_dtype)
    w3 = w3.astype(compute_dtype)
    b1 = params["b1"].astype(jnp.float32)
    b2 = params["b2"].astype(jnp.float32)
    b3 = b3.astype(jnp.float32)

    # --- explicit VMEM budget (headroom for v7x's 64 MiB / 32 MiB scoped) ----
    in_bytes = jnp.dtype(compute_dtype).itemsize
    x_tile_bytes = tile_m * k_in * in_bytes
    o_tile_bytes = tile_m * out_pad * 4
    weight_bytes = sum(int(a.size) * a.dtype.itemsize for a in (w1, b1, w2, b2, w3, b3))
    vmem_limit = min(
        2 * (x_tile_bytes + o_tile_bytes) + 2 * weight_bytes + (8 << 20),  # double-buffered
        32 << 20,
    )

    batch_map = lambda i: (i, 0)
    rep_map = lambda i: (0, 0)

    out = pl.pallas_call(
        mlp_kernel,
        out_shape=jax.ShapeDtypeStruct((b_pad, out_pad), jnp.float32),
        grid_spec=pl.GridSpec(
            grid=grid,
            in_specs=[
                pl.BlockSpec((tile_m, k_in), batch_map),
                pl.BlockSpec(w1.shape, rep_map),
                pl.BlockSpec(b1.shape, rep_map),
                pl.BlockSpec(w2.shape, rep_map),
                pl.BlockSpec(b2.shape, rep_map),
                pl.BlockSpec(w3.shape, rep_map),
                pl.BlockSpec(b3.shape, rep_map),
            ],
            out_specs=pl.BlockSpec((tile_m, out_pad), batch_map),
        ),
        compiler_params=pltpu.CompilerParams(
            dimension_semantics=("parallel",),
            vmem_limit_bytes=int(vmem_limit),
        ),
    )(xc, w1, b1, w2, b2, w3, b3)

    return out[:B, :k_out]


def init_params(key, k_in, k_out):
    """Deterministic synthetic init (shapes mirror SpecOp's nn.Linear layers)."""
    ks = jax.random.split(key, 6)
    # PyTorch Linear weight is (out, in); we store the transpose (in, out).
    w1 = jax.random.normal(ks[0], (k_in, HIDDEN), jnp.float32) * 0.1
    b1 = jax.random.normal(ks[1], (1, HIDDEN), jnp.float32) * 0.1
    w2 = jax.random.normal(ks[2], (HIDDEN, HIDDEN), jnp.float32) * 0.1
    b2 = jax.random.normal(ks[3], (1, HIDDEN), jnp.float32) * 0.1
    w3 = jax.random.normal(ks[4], (HIDDEN, k_out), jnp.float32) * 0.1
    b3 = jax.random.normal(ks[5], (1, k_out), jnp.float32) * 0.1
    return dict(w1=w1, b1=b1, w2=w2, b2=b2, w3=w3, b3=b3)


def spec_op_ref(x, p):
    h = jnp.maximum(x @ p["w1"] + p["b1"], 0.0)
    h = jnp.maximum(h @ p["w2"] + p["b2"], 0.0)
    return h @ p["w3"] + p["b3"]


if __name__ == "__main__":
    key = jax.random.PRNGKey(0)
    k_in, k_out = 32, 8
    kx, kp, kx2 = jax.random.split(key, 3)
    params = init_params(kp, k_in, k_out)

    # 1) Small-batch f32 path (matches the PyTorch reference tightly).
    batch = 8
    x = jax.random.normal(kx, (batch, k_in), jnp.float32)
    out = jax.block_until_ready(spec_op(x, params))
    ref = spec_op_ref(x, params)
    assert out.shape == (batch, k_out)
    assert jnp.allclose(out, ref, atol=1e-5, rtol=1e-5), "f32 mismatch vs reference"

    # 2) Multi-tile path: batch not a multiple of the tile -> wrapper padding,
    #    grid has several steps (pipelined, parallel-sharded on v7x).
    batch2 = 1000
    x2 = jax.random.normal(kx2, (batch2, k_in), jnp.float32)
    out2 = jax.block_until_ready(spec_op(x2, params, tile_m=256))
    ref2 = spec_op_ref(x2, params)
    assert out2.shape == (batch2, k_out)
    assert jnp.allclose(out2, ref2, atol=1e-5, rtol=1e-5), "tiled f32 mismatch"

    # 3) bf16 input/weight path (f32 accumulation) — halves HBM traffic on the
    #    memory-bound x stream; looser tolerance vs the f32 reference.
    out3 = jax.block_until_ready(spec_op(x2, params, tile_m=256, compute_dtype=jnp.bfloat16))
    assert jnp.allclose(out3, ref2, atol=5e-2, rtol=5e-2), "bf16 mismatch vs reference"

    print("KERNEL_OK")
</pallas_src>

<mosaic_0001>
module attributes {stable_mosaic.version = 11 : i64} {
  func.func @mlp_kernel(%arg0: i32, %arg1: memref<8x32xf32, #tpu.memory_space<vmem>>, %arg2: memref<32x16xf32, #tpu.memory_space<vmem>>, %arg3: memref<1x16xf32, #tpu.memory_space<vmem>>, %arg4: memref<16x16xf32, #tpu.memory_space<vmem>>, %arg5: memref<1x16xf32, #tpu.memory_space<vmem>>, %arg6: memref<16x128xf32, #tpu.memory_space<vmem>>, %arg7: memref<1x128xf32, #tpu.memory_space<vmem>>, %arg8: memref<8x128xf32, #tpu.memory_space<vmem>>) attributes {dimension_semantics = [#tpu.dimension_semantics<parallel>], iteration_bounds = array<i64: 1>, scalar_prefetch = 0 : i64, scratch_operands = 0 : i64, tpu.core_type = #tpu.core_type<tc>, window_params = [{transform_indices = @transform_0, window_bounds = array<i64: 8, 32>}, {pipeline_mode = #tpu.pipeline_mode<synchronous>, transform_indices = @transform_1, window_bounds = array<i64: 32, 16>}, {pipeline_mode = #tpu.pipeline_mode<synchronous>, transform_indices = @transform_2, window_bounds = array<i64: 1, 16>}, {pipeline_mode = #tpu.pipeline_mode<synchronous>, transform_indices = @transform_3, window_bounds = array<i64: 16, 16>}, {pipeline_mode = #tpu.pipeline_mode<synchronous>, transform_indices = @transform_4, window_bounds = array<i64: 1, 16>}, {pipeline_mode = #tpu.pipeline_mode<synchronous>, transform_indices = @transform_5, window_bounds = array<i64: 16, 128>}, {pipeline_mode = #tpu.pipeline_mode<synchronous>, transform_indices = @transform_6, window_bounds = array<i64: 1, 128>}, {transform_indices = @transform_7, window_bounds = array<i64: 8, 128>}]} {
    %c0 = arith.constant 0 : index
    %c0_0 = arith.constant 0 : index
    %0 = vector.load %arg1[%c0, %c0_0] : memref<8x32xf32, #tpu.memory_space<vmem>>, vector<8x32xf32>
    %c0_1 = arith.constant 0 : index
    %c0_2 = arith.constant 0 : index
    %1 = vector.load %arg2[%c0_1, %c0_2] : memref<32x16xf32, #tpu.memory_space<vmem>>, vector<32x16xf32>
    %cst = arith.constant dense<0.000000e+00> : vector<8x16xf32>
    %2 = tpu.matmul %0, %1, %cst {dimension_numbers = #tpu.dot_dimension_numbers<[1], [0], [0], [1], [0, 0, 1, 1], [], []>} : vector<8x32xf32>, vector<32x16xf32>, vector<8x16xf32> -> vector<8x16xf32>
    %c0_3 = arith.constant 0 : index
    %c0_4 = arith.constant 0 : index
    %3 = vector.load %arg3[%c0_3, %c0_4] : memref<1x16xf32, #tpu.memory_space<vmem>>, vector<1x16xf32>
    %4 = vector.broadcast %3 : vector<1x16xf32> to vector<8x16xf32>
    %5 = arith.addf %2, %4 : vector<8x16xf32>
    %cst_5 = arith.constant 0.000000e+00 : f32
    %6 = vector.broadcast %cst_5 : f32 to vector<8x16xf32>
    %7 = arith.maximumf %5, %6 : vector<8x16xf32>
    %c0_6 = arith.constant 0 : index
    %c0_7 = arith.constant 0 : index
    %8 = vector.load %arg4[%c0_6, %c0_7] : memref<16x16xf32, #tpu.memory_space<vmem>>, vector<16x16xf32>
    %cst_8 = arith.constant dense<0.000000e+00> : vector<8x16xf32>
    %9 = tpu.matmul %7, %8, %cst_8 {dimension_numbers = #tpu.dot_dimension_numbers<[1], [0], [0], [1], [0, 0, 1, 1], [], []>} : vector<8x16xf32>, vector<16x16xf32>, vector<8x16xf32> -> vector<8x16xf32>
    %c0_9 = arith.constant 0 : index
    %c0_10 = arith.constant 0 : index
    %10 = vector.load %arg5[%c0_9, %c0_10] : memref<1x16xf32, #tpu.memory_space<vmem>>, vector<1x16xf32>
    %11 = vector.broadcast %10 : vector<1x16xf32> to vector<8x16xf32>
    %12 = arith.addf %9, %11 : vector<8x16xf32>
    %cst_11 = arith.constant 0.000000e+00 : f32
    %13 = vector.broadcast %cst_11 : f32 to vector<8x16xf32>
    %14 = arith.maximumf %12, %13 : vector<8x16xf32>
    %c0_12 = arith.constant 0 : index
    %c0_13 = arith.constant 0 : index
    %15 = vector.load %arg6[%c0_12, %c0_13] : memref<16x128xf32, #tpu.memory_space<vmem>>, vector<16x128xf32>
    %cst_14 = arith.constant dense<0.000000e+00> : vector<8x128xf32>
    %16 = tpu.matmul %14, %15, %cst_14 {dimension_numbers = #tpu.dot_dimension_numbers<[1], [0], [0], [1], [0, 0, 1, 1], [], []>} : vector<8x16xf32>, vector<16x128xf32>, vector<8x128xf32> -> vector<8x128xf32>
    %c0_15 = arith.constant 0 : index
    %c0_16 = arith.constant 0 : index
    %17 = vector.load %arg7[%c0_15, %c0_16] : memref<1x128xf32, #tpu.memory_space<vmem>>, vector<1x128xf32>
    %18 = vector.broadcast %17 : vector<1x128xf32> to vector<8x128xf32>
    %19 = arith.addf %16, %18 : vector<8x128xf32>
    %c0_17 = arith.constant 0 : index
    %c0_18 = arith.constant 0 : index
    %20 = vector.load %arg8[%c0_17, %c0_18] : memref<8x128xf32, #tpu.memory_space<vmem>>, vector<8x128xf32>
    tpu.vector_store %arg8[%c0_17, %c0_18], %19 {strides = array<i32>} : memref<8x128xf32, #tpu.memory_space<vmem>>, vector<8x128xf32>,
    return
  }
  func.func @transform_0(%arg0: i32) -> (i32, i32) {
    %c0_i32 = arith.constant 0 : i32
    %c0_i32_0 = arith.constant 0 : i32
    return %arg0, %c0_i32 : i32, i32
  }
  func.func @transform_1(%arg0: i32) -> (i32, i32) {
    %c0_i32 = arith.constant 0 : i32
    %c0_i32_0 = arith.constant 0 : i32
    %c0_i32_1 = arith.constant 0 : i32
    return %c0_i32, %c0_i32_0 : i32, i32
  }
  func.func @transform_2(%arg0: i32) -> (i32, i32) {
    %c0_i32 = arith.constant 0 : i32
    %c0_i32_0 = arith.constant 0 : i32
    %c0_i32_1 = arith.constant 0 : i32
    return %c0_i32, %c0_i32_0 : i32, i32
  }
  func.func @transform_3(%arg0: i32) -> (i32, i32) {
    %c0_i32 = arith.constant 0 : i32
    %c0_i32_0 = arith.constant 0 : i32
    %c0_i32_1 = arith.constant 0 : i32
    return %c0_i32, %c0_i32_0 : i32, i32
  }
  func.func @transform_4(%arg0: i32) -> (i32, i32) {
    %c0_i32 = arith.constant 0 : i32
    %c0_i32_0 = arith.constant 0 : i32
    %c0_i32_1 = arith.constant 0 : i32
    return %c0_i32, %c0_i32_0 : i32, i32
  }
  func.func @transform_5(%arg0: i32) -> (i32, i32) {
    %c0_i32 = arith.constant 0 : i32
    %c0_i32_0 = arith.constant 0 : i32
    %c0_i32_1 = arith.constant 0 : i32
    return %c0_i32, %c0_i32_0 : i32, i32
  }
  func.func @transform_6(%arg0: i32) -> (i32, i32) {
    %c0_i32 = arith.constant 0 : i32
    %c0_i32_0 = arith.constant 0 : i32
    %c0_i32_1 = arith.constant 0 : i32
    return %c0_i32, %c0_i32_0 : i32, i32
  }
  func.func @transform_7(%arg0: i32) -> (i32, i32) {
    %c0_i32 = arith.constant 0 : i32
    %c0_i32_0 = arith.constant 0 : i32
    return %arg0, %c0_i32 : i32, i32
  }
}

</mosaic_0001>

<llo_original>
// kernel: tpu_custom_call.1
$region0: #{tpu_custom_call.1}
  #allocation0 [shape = 'u32[]', space=smem, size = 0x4, offset = 0x4, fixed_abs, tag = 'smem constant byte address 0x4 - core index']
  #allocation1 [shape = 'u32[144,128]{1,0:T(1,128)}', space=vmem, size = 0x12000, scoped, tag = 'internal scratch']
  %s0 = inlined_call_operand.vmem [shape: f32[8,32], index: 0, kind: input, shape index: {}]
  %s1 = inlined_call_operand.vmem [shape: f32[32,16], index: 1, kind: input, shape index: {}]
  %s2 = inlined_call_operand.vmem [shape: f32[1,16], index: 2, kind: input, shape index: {}]
  %s3 = inlined_call_operand.vmem [shape: f32[16,16], index: 3, kind: input, shape index: {}]
  %s4 = inlined_call_operand.vmem [shape: f32[1,16], index: 4, kind: input, shape index: {}]
  %s5 = inlined_call_operand.vmem [shape: f32[16,128], index: 5, kind: input, shape index: {}]
  %s6 = inlined_call_operand.vmem [shape: f32[1,128], index: 6, kind: input, shape index: {}]
  %s7 = inlined_call_operand.hbm [shape: f32[8,128], index: 7, kind: output, shape index: {}]
  %s8 = sld [smem:[#allocation0]]
  $region38: #{tpu_custom_call.1} parent=0
    _
  %s10 = ssub.s32 1, %s8
  %s11 = scalar_select 0, %s10, %s8
  $region1: #{tpu_custom_call.1} parent=0
    #allocation2 [shape = 'u8[4096]{0}', space=vmem, size = 0x1000, scoped, tag = 'output window, operand 0, single buffered']
    #allocation3 [shape = 's32[1]{0}', space=sflag, size = 0x4, scoped, tag = 'scoped memory for tpu_custom_call.1']
    %12 = vsyncpa [#allocation3], 0
    // Predicated region
    $region2: #{tpu_custom_call.1} parent=1 // pred_check
      _
    $region3: #{tpu_custom_call.1} parent=1 // pred_check_branch
      %14 = sbr.rel (0) target = $region5
    $region4: #{tpu_custom_call.1} parent=1 // pred_region
      _
    $region5: #{tpu_custom_call.1} parent=1 // pred_fallthru
      _
    // Predicated region
    $region6: #{tpu_custom_call.1} parent=1 // pred_check
      _
    $region7: #{tpu_custom_call.1} parent=1 // pred_check_branch
      %16 = sbr.rel (0) target = $region9
    $region8: #{tpu_custom_call.1} parent=1 // pred_region
      _
    $region9: #{tpu_custom_call.1} parent=1 // pred_fallthru
      _
    // Predicated region
    $region10: #{tpu_custom_call.1} parent=1 // pred_check
      _
    $region11: #{tpu_custom_call.1} parent=1 // pred_check_branch
      %18 = sbr.rel (0) target = $region13
    $region12: #{tpu_custom_call.1} parent=1 // pred_region
      _
    $region13: #{tpu_custom_call.1} parent=1 // pred_fallthru
      _
    // Predicated region
    $region14: #{tpu_custom_call.1} parent=1 // pred_check
      _
    $region15: #{tpu_custom_call.1} parent=1 // pred_check_branch
      %20 = sbr.rel (0) target = $region17
    $region16: #{tpu_custom_call.1} parent=1 // pred_region
      _
    $region17: #{tpu_custom_call.1} parent=1 // pred_fallthru
      _
    // Predicated region
    $region18: #{tpu_custom_call.1} parent=1 // pred_check
      _
    $region19: #{tpu_custom_call.1} parent=1 // pred_check_branch
      %22 = sbr.rel (0) target = $region21
    $region20: #{tpu_custom_call.1} parent=1 // pred_region
      _
    $region21: #{tpu_custom_call.1} parent=1 // pred_fallthru
      _
    // Predicated region
    $region22: #{tpu_custom_call.1} parent=1 // pred_check
      _
    $region23: #{tpu_custom_call.1} parent=1 // pred_check_branch
      %24 = sbr.rel (0) target = $region25
    $region24: #{tpu_custom_call.1} parent=1 // pred_region
      _
    $region25: #{tpu_custom_call.1} parent=1 // pred_fallthru
      _
    // Predicated region
    $region26: #{tpu_custom_call.1} parent=1 // pred_check
      _
    $region27: #{tpu_custom_call.1} parent=1 // pred_check_branch
      %26 = sbr.rel (0) target = $region29
    $region28: #{tpu_custom_call.1} parent=1 // pred_region
      _
    $region29: #{tpu_custom_call.1} parent=1 // pred_fallthru
      _
    %v27 = vld [vmem:[%s0] sm:$0xff]
    %v28 = vld [vmem:[%s1] sm:$0xff]
    %v29 = vld [vmem:[%s1 + $0x8] sm:$0xff]
    %v30 = vld [vmem:[%s1 + $0x10] sm:$0xff]
    %v31 = vld [vmem:[%s1 + $0x18] sm:$0xff]
    %v32 = vld [vmem:[%s2] sm:$0x1]
    %v34 = vlaneseq
    %v35 = vshrl.u32 %v34, 7
    %v36 = vsub.s32 0, %v35
    %v37 = vrot.slane %v32, %v36
    %vm39 = vcmask 261120
    %v41 = vsel %vm39, %v27, 0
    %43 = vmatprep.subr.mxu0 0.0
    %44 = vmatpush1.msra.mxu0 0.0
    %45 = vmatprep.subr.mxu0 0.0
    %46 = vmatpush1.msra.mxu0 0.0
    %47 = vmatprep.subr.mxu0 0.0
    %48 = vmatpush1.msra.mxu0 0.0
    %49 = vmatprep.subr.mxu0 0.0
    %50 = vmatpush1.msra.mxu0 0.0
    %51 = vmatprep.subr.mxu0 0.0
    %52 = vmatpush1.msra.mxu0 0.0
    %53 = vmatprep.subr.mxu0 0.0
    %54 = vmatpush1.msra.mxu0 0.0
    %55 = vmatprep.subr.mxu0 0.0
    %56 = vmatpush1.msra.mxu0 0.0
    %57 = vmatprep.subr.mxu0 0.0
    %58 = vmatpush1.msra.mxu0 0.0
    %59 = vmatprep.subr.mxu0 0.0
    %60 = vmatpush1.msra.mxu0 0.0
    %61 = vmatprep.subr.mxu0 0.0
    %62 = vmatpush1.msra.mxu0 0.0
    %63 = vmatprep.subr.mxu0 0.0
    %64 = vmatpush1.msra.mxu0 0.0
    %65 = vmatprep.subr.mxu0 0.0
    %66 = vmatpush1.msra.mxu0 0.0
    %67 = vmatprep.subr.mxu0 0.0
    %68 = vmatpush1.msra.mxu0 %v31
    %69 = vmatprep.subr.mxu0 0.0
    %70 = vmatpush1.msra.mxu0 %v30
    %71 = vmatprep.subr.mxu0 0.0
    %72 = vmatpush1.msra.mxu0 %v29
    %73 = vmatprep.subr.mxu0 0.0
    %74 = vmatpush1.msra.mxu0 %v28
    %75 = vmatprep.subr.mxu0 0.0
    %76 = vmatpush2.msra.mxu0 0.0
    %77 = vmatprep.subr.mxu0 0.0
    %78 = vmatpush2.msra.mxu0 0.0
    %79 = vmatprep.subr.mxu0 0.0
    %80 = vmatpush2.msra.mxu0 0.0
    %81 = vmatprep.subr.mxu0 0.0
    %82 = vmatpush2.msra.mxu0 0.0
    %83 = vmatprep.subr.mxu0 0.0
    %84 = vmatpush2.msra.mxu0 0.0
    %85 = vmatprep.subr.mxu0 0.0
    %86 = vmatpush2.msra.mxu0 0.0
    %87 = vmatprep.subr.mxu0 0.0
    %88 = vmatpush2.msra.mxu0 0.0
    %89 = vmatprep.subr.mxu0 0.0
    %90 = vmatpush2.msra.mxu0 0.0
    %91 = vmatprep.subr.mxu0 0.0
    %92 = vmatpush2.msra.mxu0 0.0
    %93 = vmatprep.subr.mxu0 0.0
    %94 = vmatpush2.msra.mxu0 0.0
    %95 = vmatprep.subr.mxu0 0.0
    %96 = vmatpush2.msra.mxu0 0.0
    %97 = vmatprep.subr.mxu0 0.0
    %98 = vmatpush2.msra.mxu0 0.0
    %99 = vmatprep.subr.mxu0 0.0
    %100 = vmatpush2.msra.mxu0 0.0
    %101 = vmatprep.subr.mxu0 0.0
    %102 = vmatpush2.msra.mxu0 0.0
    %103 = vmatprep.subr.mxu0 0.0
    %104 = vmatpush2.msra.mxu0 0.0
    %105 = vmatprep.subr.mxu0 0.0
    %106 = vmatpush2.msra.mxu0 0.0
    %107 = vmatprep.mubr.f32.mxu0 0.0
    %108 = vmatmul.mubr.f32.gmra.mxu0 %v41
    %v109 = vpop.f32.mrf.mxu0
    %v110 = vadd.f32 %v37, %v109
    %v111 = vpop.f32.mrf.mxu0
    %112 = vdwg.mxu0
    %v113 = vmax.f32 %v110, 0.0
    %v114 = vld [vmem:[%s3] sm:$0xff]
    %v115 = vld [vmem:[%s3 + $0x8] sm:$0xff]
    %v116 = vld [vmem:[%s4] sm:$0x1]
    %v118 = vlaneseq
    %v119 = vshrl.u32 %v118, 7
    %v120 = vsub.s32 0, %v119
    %v121 = vrot.slane %v116, %v120
    %vm123 = vcmask 130048
    %v125 = vsel %vm123, %v113, 0
    %127 = vmatprep.subr.mxu0 0.0
    %128 = vmatpush1.msra.mxu0 0.0
    %129 = vmatprep.subr.mxu0 0.0
    %130 = vmatpush1.msra.mxu0 0.0
    %131 = vmatprep.subr.mxu0 0.0
    %132 = vmatpush1.msra.mxu0 0.0
    %133 = vmatprep.subr.mxu0 0.0
    %134 = vmatpush1.msra.mxu0 0.0
    %135 = vmatprep.subr.mxu0 0.0
    %136 = vmatpush1.msra.mxu0 0.0
    %137 = vmatprep.subr.mxu0 0.0
    %138 = vmatpush1.msra.mxu0 0.0
    %139 = vmatprep.subr.mxu0 0.0
    %140 = vmatpush1.msra.mxu0 0.0
    %141 = vmatprep.subr.mxu0 0.0
    %142 = vmatpush1.msra.mxu0 0.0
    %143 = vmatprep.subr.mxu0 0.0
    %144 = vmatpush1.msra.mxu0 0.0
    %145 = vmatprep.subr.mxu0 0.0
    %146 = vmatpush1.msra.mxu0 0.0
    %147 = vmatprep.subr.mxu0 0.0
    %148 = vmatpush1.msra.mxu0 0.0
    %149 = vmatprep.subr.mxu0 0.0
    %150 = vmatpush1.msra.mxu0 0.0
    %151 = vmatprep.subr.mxu0 0.0
    %152 = vmatpush1.msra.mxu0 0.0
    %153 = vmatprep.subr.mxu0 0.0
    %154 = vmatpush1.msra.mxu0 0.0
    %155 = vmatprep.subr.mxu0 0.0
    %156 = vmatpush1.msra.mxu0 %v115
    %157 = vmatprep.subr.mxu0 0.0
    %158 = vmatpush1.msra.mxu0 %v114
    %159 = vmatprep.subr.mxu0 0.0
    %160 = vmatpush2.msra.mxu0 0.0
    %161 = vmatprep.subr.mxu0 0.0
    %162 = vmatpush2.msra.mxu0 0.0
    %163 = vmatprep.subr.mxu0 0.0
    %164 = vmatpush2.msra.mxu0 0.0
    %165 = vmatprep.subr.mxu0 0.0
    %166 = vmatpush2.msra.mxu0 0.0
    %167 = vmatprep.subr.mxu0 0.0
    %168 = vmatpush2.msra.mxu0 0.0
    %169 = vmatprep.subr.mxu0 0.0
    %170 = vmatpush2.msra.mxu0 0.0
    %171 = vmatprep.subr.mxu0 0.0
    %172 = vmatpush2.msra.mxu0 0.0
    %173 = vmatprep.subr.mxu0 0.0
    %174 = vmatpush2.msra.mxu0 0.0
    %175 = vmatprep.subr.mxu0 0.0
    %176 = vmatpush2.msra.mxu0 0.0
    %177 = vmatprep.subr.mxu0 0.0
    %178 = vmatpush2.msra.mxu0 0.0
    %179 = vmatprep.subr.mxu0 0.0
    %180 = vmatpush2.msra.mxu0 0.0
    %181 = vmatprep.subr.mxu0 0.0
    %182 = vmatpush2.msra.mxu0 0.0
    %183 = vmatprep.subr.mxu0 0.0
    %184 = vmatpush2.msra.mxu0 0.0
    %185 = vmatprep.subr.mxu0 0.0
    %186 = vmatpush2.msra.mxu0 0.0
    %187 = vmatprep.subr.mxu0 0.0
    %188 = vmatpush2.msra.mxu0 0.0
    %189 = vmatprep.subr.mxu0 0.0
    %190 = vmatpush2.msra.mxu0 0.0
    %191 = vmatprep.mubr.f32.mxu0 0.0
    %192 = vmatmul.mubr.f32.gmra.mxu0 %v125
    %v193 = vpop.f32.mrf.mxu0
    %v194 = vadd.f32 %v121, %v193
    %v195 = vpop.f32.mrf.mxu0
    %196 = vdwg.mxu0
    %v197 = vmax.f32 %v194, 0.0
    %v198 = vld [vmem:[%s5] sm:$0xff]
    %v199 = vld [vmem:[%s5 + $0x8] sm:$0xff]
    %v200 = vld [vmem:[%s6] sm:$0x1]
    %v202 = vlaneseq
    %v203 = vshrl.u32 %v202, 7
    %v204 = vsub.s32 0, %v203
    %v205 = vrot.slane %v200, %v204
    %v208 = vsel %vm123, %v197, 0
    %210 = vmatprep.subr.mxu0 0.0
    %211 = vmatpush1.msra.mxu0 0.0
    %212 = vmatprep.subr.mxu0 0.0
    %213 = vmatpush1.msra.mxu0 0.0
    %214 = vmatprep.subr.mxu0 0.0
    %215 = vmatpush1.msra.mxu0 0.0
    %216 = vmatprep.subr.mxu0 0.0
    %217 = vmatpush1.msra.mxu0 0.0
    %218 = vmatprep.subr.mxu0 0.0
    %219 = vmatpush1.msra.mxu0 0.0
    %220 = vmatprep.subr.mxu0 0.0
    %221 = vmatpush1.msra.mxu0 0.0
    %222 = vmatprep.subr.mxu0 0.0
    %223 = vmatpush1.msra.mxu0 0.0
    %224 = vmatprep.subr.mxu0 0.0
    %225 = vmatpush1.msra.mxu0 0.0
    %226 = vmatprep.subr.mxu0 0.0
    %227 = vmatpush1.msra.mxu0 0.0
    %228 = vmatprep.subr.mxu0 0.0
    %229 = vmatpush1.msra.mxu0 0.0
    %230 = vmatprep.subr.mxu0 0.0
    %231 = vmatpush1.msra.mxu0 0.0
    %232 = vmatprep.subr.mxu0 0.0
    %233 = vmatpush1.msra.mxu0 0.0
    %234 = vmatprep.subr.mxu0 0.0
    %235 = vmatpush1.msra.mxu0 0.0
    %236 = vmatprep.subr.mxu0 0.0
    %237 = vmatpush1.msra.mxu0 0.0
    %238 = vmatprep.subr.mxu0 0.0
    %239 = vmatpush1.msra.mxu0 %v199
    %240 = vmatprep.subr.mxu0 0.0
    %241 = vmatpush1.msra.mxu0 %v198
    %242 = vmatprep.subr.mxu0 0.0
    %243 = vmatpush2.msra.mxu0 0.0
    %244 = vmatprep.subr.mxu0 0.0
    %245 = vmatpush2.msra.mxu0 0.0
    %246 = vmatprep.subr.mxu0 0.0
    %247 = vmatpush2.msra.mxu0 0.0
    %248 = vmatprep.subr.mxu0 0.0
    %249 = vmatpush2.msra.mxu0 0.0
    %250 = vmatprep.subr.mxu0 0.0
    %251 = vmatpush2.msra.mxu0 0.0
    %252 = vmatprep.subr.mxu0 0.0
    %253 = vmatpush2.msra.mxu0 0.0
    %254 = vmatprep.subr.mxu0 0.0
    %255 = vmatpush2.msra.mxu0 0.0
    %256 = vmatprep.subr.mxu0 0.0
    %257 = vmatpush2.msra.mxu0 0.0
    %258 = vmatprep.subr.mxu0 0.0
    %259 = vmatpush2.msra.mxu0 0.0
    %260 = vmatprep.subr.mxu0 0.0
    %261 = vmatpush2.msra.mxu0 0.0
    %262 = vmatprep.subr.mxu0 0.0
    %263 = vmatpush2.msra.mxu0 0.0
    %264 = vmatprep.subr.mxu0 0.0
    %265 = vmatpush2.msra.mxu0 0.0
    %266 = vmatprep.subr.mxu0 0.0
    %267 = vmatpush2.msra.mxu0 0.0
    %268 = vmatprep.subr.mxu0 0.0
    %269 = vmatpush2.msra.mxu0 0.0
    %270 = vmatprep.subr.mxu0 0.0
    %271 = vmatpush2.msra.mxu0 0.0
    %272 = vmatprep.subr.mxu0 0.0
    %273 = vmatpush2.msra.mxu0 0.0
    %274 = vmatprep.mubr.f32.mxu0 0.0
    %275 = vmatmul.mubr.f32.gmra.mxu0 %v208
    %v276 = vpop.f32.mrf.mxu0
    %v277 = vadd.f32 %v205, %v276
    %v278 = vpop.f32.mrf.mxu0
    %279 = vdwg.mxu0
    %280 = vst [vmem:[#allocation2] sm:$0xff] %v277
    // Predicated region
    $region30: #{tpu_custom_call.1} parent=1 // pred_check
      _
    $region31: #{tpu_custom_call.1} parent=1 // pred_check_branch
      %282 = sbr.rel (0) target = $region33
    $region32: #{tpu_custom_call.1} parent=1 // pred_region
      %s284 = ssub.s32 128, 128
      %285 = vsyncadd [#allocation3], %s284
      %s287 = sshll.u32 [#allocation2], 4
      %s288 = int_to_ptr.vmem [resolvable:$true] %s287
      %290 = dma.vmem_to_hbm [thread:$0]  %s288, 128, %s7, [#allocation3]
    $region33: #{tpu_custom_call.1} parent=1 // pred_fallthru
      _
    // Predicated region
    $region34: #{tpu_custom_call.1} parent=1 // pred_check
      _
    $region35: #{tpu_custom_call.1} parent=1 // pred_check_branch
      %292 = sbr.rel (0) target = $region37
    $region36: #{tpu_custom_call.1} parent=1 // pred_region
      %293 = dma.done [#allocation3], 128
    $region37: #{tpu_custom_call.1} parent=1 // pred_fallthru
      _
    %294 = vsyncpa [#allocation3], 1

</llo_original>
